<compile_context>
chip_gen: v7x
topology: tpu7x:2x2x1
jax: 0.10.0
libtpu: 0.0.40
codegen_flags: <defaults>
</compile_context>

<pallas_src>
import jax
import jax.numpy as jnp
from jax.experimental import pallas as pl
from jax.experimental.pallas import tpu as pltpu


def _fused_ode_kernel(x_ref, w1_ref, b1_ref, w2_ref, b2_ref, out_ref):
    """out = tanh(x @ W1 + b1) @ W2 + b2  (block-structured fused weights)."""
    x = x_ref[...]                                                    # [tb, D]
    t = jnp.tanh(
        jnp.dot(x, w1_ref[...], preferred_element_type=jnp.float32) + b1_ref[...]
    )                                                                 # [tb, H]
    out = jnp.dot(t, w2_ref[...], preferred_element_type=jnp.float32) + b2_ref[...]
    out_ref[...] = out.astype(out_ref.dtype)                          # [tb, D]


def pack_fused_params(p, z_x_size, z_a_size, h_size):
    """Build block-structured fused weights (done once, outside the kernel).

    W1: [D, H]   rows 0:zx, cols 0:zx       = w1x
                 rows zx:zx+za, cols zx:+za = w1a
                 all D rows, cols zx+za:    = w1h          (zeros elsewhere)
    W2: [H, D]   block-diagonal w2x / w2a / w2h
    """
    zx, za, h = z_x_size, z_a_size, h_size
    D = zx + za + h
    H = zx + za + zx  # hidden widths of the three branch MLPs

    w1 = jnp.zeros((D, H), jnp.float32)
    w1 = w1.at[:zx, :zx].set(p["w1x"])
    w1 = w1.at[zx:zx + za, zx:zx + za].set(p["w1a"])
    w1 = w1.at[:, zx + za:].set(p["w1h"])
    b1 = jnp.concatenate([p["b1x"], p["b1a"], p["b1h"]], axis=1)      # [1, H]

    w2 = jnp.zeros((H, D), jnp.float32)
    w2 = w2.at[:zx, :zx].set(p["w2x"])
    w2 = w2.at[zx:zx + za, zx:zx + za].set(p["w2a"])
    w2 = w2.at[zx + za:, zx + za:].set(p["w2h"])
    b2 = jnp.concatenate([p["b2x"], p["b2a"], p["b2h"]], axis=1)      # [1, D]

    return w1, b1, w2, b2


def ode_function_for_adaptive_fwd(x, fused_params, *, batch_tile=128):
    """x: [B, z_x+z_a+h] float32.  fused_params: output of pack_fused_params."""
    w1, b1, w2, b2 = fused_params
    B, D = x.shape
    H = w1.shape[1]
    assert w1.shape == (D, H) and w2.shape == (H, D)
    assert b1.shape == (1, H) and b2.shape == (1, D)

    # Batch tiling: tile of `batch_tile` rows when B is large, otherwise one
    # block padded to the 8-sublane granule.
    if B >= batch_tile:
        tb = batch_tile
    else:
        tb = max(8, ((B + 7) // 8) * 8)
    Bp = ((B + tb - 1) // tb) * tb
    if Bp != B:
        x = jnp.pad(x, ((0, Bp - B), (0, 0)))

    grid = (Bp // tb,)

    out = pl.pallas_call(
        _fused_ode_kernel,
        out_shape=jax.ShapeDtypeStruct((Bp, D), jnp.float32),
        grid=grid,
        in_specs=[
            pl.BlockSpec((tb, D), lambda i: (i, 0)),       # x batch tile
            pl.BlockSpec((D, H), lambda i: (0, 0)),        # W1 resident
            pl.BlockSpec((1, H), lambda i: (0, 0)),        # b1 resident
            pl.BlockSpec((H, D), lambda i: (0, 0)),        # W2 resident
            pl.BlockSpec((1, D), lambda i: (0, 0)),        # b2 resident
        ],
        out_specs=pl.BlockSpec((tb, D), lambda i: (i, 0)),
        compiler_params=pltpu.CompilerParams(
            dimension_semantics=("parallel",)),            # megacore / v7x 2-TC
    )(x, w1, b1, w2, b2)

    return out[:B]


def init_params(key, z_x_size, z_a_size, h_size):
    """Deterministic synthetic parameters. Linear weights stored as [in, out]."""
    ks = jax.random.split(key, 12)

    def w(k, fan_in, fan_out):
        scale = 1.0 / jnp.sqrt(fan_in)
        return jax.random.uniform(k, (fan_in, fan_out), jnp.float32, -scale, scale)

    def b(k, fan_in, fan_out):
        scale = 1.0 / jnp.sqrt(fan_in)
        return jax.random.uniform(k, (1, fan_out), jnp.float32, -scale, scale)

    concat = z_x_size + z_a_size + h_size
    return {
        # f_z_x
        "w1x": w(ks[0], z_x_size, z_x_size), "b1x": b(ks[1], z_x_size, z_x_size),
        "w2x": w(ks[2], z_x_size, z_x_size), "b2x": b(ks[3], z_x_size, z_x_size),
        # f_z_a
        "w1a": w(ks[4], z_a_size, z_a_size), "b1a": b(ks[5], z_a_size, z_a_size),
        "w2a": w(ks[6], z_a_size, z_a_size), "b2a": b(ks[7], z_a_size, z_a_size),
        # f_h
        "w1h": w(ks[8], concat, z_x_size),   "b1h": b(ks[9], concat, z_x_size),
        "w2h": w(ks[10], z_x_size, h_size),  "b2h": b(ks[11], z_x_size, h_size),
    }


def reference_fwd(x, p, z_x_size, z_a_size, h_size):
    """Pure-JAX reference matching the PyTorch module (with Tanh activation)."""
    z_x = x[:, :z_x_size]
    z_a = x[:, z_x_size:z_x_size + z_a_size]
    d_z_x = jnp.tanh(z_x @ p["w1x"] + p["b1x"]) @ p["w2x"] + p["b2x"]
    d_z_a = jnp.tanh(z_a @ p["w1a"] + p["b1a"]) @ p["w2a"] + p["b2a"]
    d_h = jnp.tanh(x @ p["w1h"] + p["b1h"]) @ p["w2h"] + p["b2h"]
    return jnp.concatenate([d_z_x, d_z_a, d_h], axis=1)


if __name__ == "__main__":
    z_x_size, z_a_size, h_size = 32, 32, 32
    batch = 8

    key = jax.random.PRNGKey(0)
    k_x, k_p = jax.random.split(key)
    params = init_params(k_p, z_x_size, z_a_size, h_size)
    x = jax.random.normal(k_x, (batch, z_x_size + z_a_size + h_size), jnp.float32)

    # Pack block-structured fused weights once (host side, outside the kernel).
    fused = pack_fused_params(params, z_x_size, z_a_size, h_size)

    out = ode_function_for_adaptive_fwd(x, fused)
    out = jax.block_until_ready(out)

    ref = reference_fwd(x, params, z_x_size, z_a_size, h_size)
    assert out.shape == (batch, z_x_size + z_a_size + h_size)
    assert jnp.max(jnp.abs(out - ref)) < 1e-4, "mismatch vs reference"

    print("KERNEL_OK")
</pallas_src>

<mosaic_0001>
module attributes {stable_mosaic.version = 11 : i64} {
  func.func @_fused_ode_kernel(%arg0: i32, %arg1: memref<8x96xf32, #tpu.memory_space<vmem>>, %arg2: memref<96x96xf32, #tpu.memory_space<vmem>>, %arg3: memref<1x96xf32, #tpu.memory_space<vmem>>, %arg4: memref<96x96xf32, #tpu.memory_space<vmem>>, %arg5: memref<1x96xf32, #tpu.memory_space<vmem>>, %arg6: memref<8x96xf32, #tpu.memory_space<vmem>>) attributes {dimension_semantics = [#tpu.dimension_semantics<parallel>], iteration_bounds = array<i64: 1>, scalar_prefetch = 0 : i64, scratch_operands = 0 : i64, tpu.core_type = #tpu.core_type<tc>, window_params = [{transform_indices = @transform_0, window_bounds = array<i64: 8, 96>}, {pipeline_mode = #tpu.pipeline_mode<synchronous>, transform_indices = @transform_1, window_bounds = array<i64: 96, 96>}, {pipeline_mode = #tpu.pipeline_mode<synchronous>, transform_indices = @transform_2, window_bounds = array<i64: 1, 96>}, {pipeline_mode = #tpu.pipeline_mode<synchronous>, transform_indices = @transform_3, window_bounds = array<i64: 96, 96>}, {pipeline_mode = #tpu.pipeline_mode<synchronous>, transform_indices = @transform_4, window_bounds = array<i64: 1, 96>}, {transform_indices = @transform_5, window_bounds = array<i64: 8, 96>}]} {
    %c0 = arith.constant 0 : index
    %c0_0 = arith.constant 0 : index
    %0 = vector.load %arg1[%c0, %c0_0] : memref<8x96xf32, #tpu.memory_space<vmem>>, vector<8x96xf32>
    %c0_1 = arith.constant 0 : index
    %c0_2 = arith.constant 0 : index
    %1 = vector.load %arg2[%c0_1, %c0_2] : memref<96x96xf32, #tpu.memory_space<vmem>>, vector<96x96xf32>
    %cst = arith.constant dense<0.000000e+00> : vector<8x96xf32>
    %2 = tpu.matmul %0, %1, %cst {dimension_numbers = #tpu.dot_dimension_numbers<[1], [0], [0], [1], [0, 0, 1, 1], [], []>} : vector<8x96xf32>, vector<96x96xf32>, vector<8x96xf32> -> vector<8x96xf32>
    %c0_3 = arith.constant 0 : index
    %c0_4 = arith.constant 0 : index
    %3 = vector.load %arg3[%c0_3, %c0_4] : memref<1x96xf32, #tpu.memory_space<vmem>>, vector<1x96xf32>
    %4 = vector.broadcast %3 : vector<1x96xf32> to vector<8x96xf32>
    %5 = arith.addf %2, %4 : vector<8x96xf32>
    %6 = math.tanh %5 : vector<8x96xf32>
    %c0_5 = arith.constant 0 : index
    %c0_6 = arith.constant 0 : index
    %7 = vector.load %arg4[%c0_5, %c0_6] : memref<96x96xf32, #tpu.memory_space<vmem>>, vector<96x96xf32>
    %cst_7 = arith.constant dense<0.000000e+00> : vector<8x96xf32>
    %8 = tpu.matmul %6, %7, %cst_7 {dimension_numbers = #tpu.dot_dimension_numbers<[1], [0], [0], [1], [0, 0, 1, 1], [], []>} : vector<8x96xf32>, vector<96x96xf32>, vector<8x96xf32> -> vector<8x96xf32>
    %c0_8 = arith.constant 0 : index
    %c0_9 = arith.constant 0 : index
    %9 = vector.load %arg5[%c0_8, %c0_9] : memref<1x96xf32, #tpu.memory_space<vmem>>, vector<1x96xf32>
    %10 = vector.broadcast %9 : vector<1x96xf32> to vector<8x96xf32>
    %11 = arith.addf %8, %10 : vector<8x96xf32>
    %c0_10 = arith.constant 0 : index
    %c0_11 = arith.constant 0 : index
    %12 = vector.load %arg6[%c0_10, %c0_11] : memref<8x96xf32, #tpu.memory_space<vmem>>, vector<8x96xf32>
    tpu.vector_store %arg6[%c0_10, %c0_11], %11 {strides = array<i32>} : memref<8x96xf32, #tpu.memory_space<vmem>>, vector<8x96xf32>,
    return
  }
  func.func @transform_0(%arg0: i32) -> (i32, i32) {
    %c0_i32 = arith.constant 0 : i32
    %c0_i32_0 = arith.constant 0 : i32
    return %arg0, %c0_i32 : i32, i32
  }
  func.func @transform_1(%arg0: i32) -> (i32, i32) {
    %c0_i32 = arith.constant 0 : i32
    %c0_i32_0 = arith.constant 0 : i32
    %c0_i32_1 = arith.constant 0 : i32
    return %c0_i32, %c0_i32_0 : i32, i32
  }
  func.func @transform_2(%arg0: i32) -> (i32, i32) {
    %c0_i32 = arith.constant 0 : i32
    %c0_i32_0 = arith.constant 0 : i32
    %c0_i32_1 = arith.constant 0 : i32
    return %c0_i32, %c0_i32_0 : i32, i32
  }
  func.func @transform_3(%arg0: i32) -> (i32, i32) {
    %c0_i32 = arith.constant 0 : i32
    %c0_i32_0 = arith.constant 0 : i32
    %c0_i32_1 = arith.constant 0 : i32
    return %c0_i32, %c0_i32_0 : i32, i32
  }
  func.func @transform_4(%arg0: i32) -> (i32, i32) {
    %c0_i32 = arith.constant 0 : i32
    %c0_i32_0 = arith.constant 0 : i32
    %c0_i32_1 = arith.constant 0 : i32
    return %c0_i32, %c0_i32_0 : i32, i32
  }
  func.func @transform_5(%arg0: i32) -> (i32, i32) {
    %c0_i32 = arith.constant 0 : i32
    %c0_i32_0 = arith.constant 0 : i32
    return %arg0, %c0_i32 : i32, i32
  }
}

</mosaic_0001>

<llo_original>
// kernel: tpu_custom_call.1
$region0: #{tpu_custom_call.1}
  #allocation0 [shape = 'u32[]', space=smem, size = 0x4, offset = 0x4, fixed_abs, tag = 'smem constant byte address 0x4 - core index']
  #allocation1 [shape = 'u32[144,128]{1,0:T(1,128)}', space=vmem, size = 0x12000, scoped, tag = 'internal scratch']
  %s0 = inlined_call_operand.hbm [shape: f32[8,96], index: 0, kind: input, shape index: {}]
  %s1 = inlined_call_operand.hbm [shape: f32[96,96], index: 1, kind: input, shape index: {}]
  %s2 = inlined_call_operand.vmem [shape: f32[1,96], index: 2, kind: input, shape index: {}]
  %s3 = inlined_call_operand.hbm [shape: f32[96,96], index: 3, kind: input, shape index: {}]
  %s4 = inlined_call_operand.vmem [shape: f32[1,96], index: 4, kind: input, shape index: {}]
  %s5 = inlined_call_operand.hbm [shape: f32[8,96], index: 5, kind: output, shape index: {}]
  %s6 = sld [smem:[#allocation0]]
  $region42: #{tpu_custom_call.1} parent=0
    _
  %s8 = ssub.s32 1, %s6
  %s9 = scalar_select 0, %s8, %s6
  $region1: #{tpu_custom_call.1} parent=0
    #allocation2 [shape = 'u8[4096]{0}', space=vmem, size = 0x1000, scoped, tag = 'input window, operand 0, single buffered']
    #allocation3 [shape = 's32[1]{0}', space=sflag, size = 0x4, scoped, tag = 'scoped memory for tpu_custom_call.1']
    #allocation4 [shape = 's32[1]{0}', space=sflag, size = 0x4, scoped, tag = 'scoped memory for tpu_custom_call.1']
    #allocation5 [shape = 'u8[49152]{0}', space=vmem, size = 0xc000, scoped, tag = 'input window, operand 1, single buffered']
    #allocation6 [shape = 's32[1]{0}', space=sflag, size = 0x4, scoped, tag = 'scoped memory for tpu_custom_call.1']
    #allocation7 [shape = 'u8[49152]{0}', space=vmem, size = 0xc000, scoped, tag = 'input window, operand 3, single buffered']
    #allocation8 [shape = 'u8[4096]{0}', space=vmem, size = 0x1000, scoped, tag = 'output window, operand 0, single buffered']
    %10 = vsyncpa [#allocation3], 0
    %11 = vsyncpa [#allocation6], 0
    %12 = vsyncpa [#allocation4], 0
    // Predicated region
    $region2: #{tpu_custom_call.1} parent=1 // pred_check
      _
    $region3: #{tpu_custom_call.1} parent=1 // pred_check_branch
      %14 = sbr.rel (0) target = $region5
    $region4: #{tpu_custom_call.1} parent=1 // pred_region
      %s16 = ssub.s32 128, 128
      %17 = vsyncadd [#allocation3], %s16
      %s19 = sshll.u32 [#allocation2], 4
      %s20 = int_to_ptr.vmem [resolvable:$true] %s19
      %22 = dma.hbm_to_vmem [thread:$0]  %s0, 128, %s20, [#allocation3]
    $region5: #{tpu_custom_call.1} parent=1 // pred_fallthru
      _
    // Predicated region
    $region6: #{tpu_custom_call.1} parent=1 // pred_check
      _
    $region7: #{tpu_custom_call.1} parent=1 // pred_check_branch
      %24 = sbr.rel (0) target = $region9
    $region8: #{tpu_custom_call.1} parent=1 // pred_region
      %s26 = ssub.s32 1536, 1536
      %27 = vsyncadd [#allocation6], %s26
      %s28 = sshll.u32 [#allocation5], 4
      %s29 = int_to_ptr.vmem [resolvable:$true] %s28
      %34 = dma.hbm_to_vmem [thread:$0]  %s1, 1536, %s29, [#allocation6], 128, 128, 8
    $region9: #{tpu_custom_call.1} parent=1 // pred_fallthru
      _
    // Predicated region
    $region10: #{tpu_custom_call.1} parent=1 // pred_check
      _
    $region11: #{tpu_custom_call.1} parent=1 // pred_check_branch
      %36 = sbr.rel (0) target = $region13
    $region12: #{tpu_custom_call.1} parent=1 // pred_region
      _
    $region13: #{tpu_custom_call.1} parent=1 // pred_fallthru
      _
    // Predicated region
    $region14: #{tpu_custom_call.1} parent=1 // pred_check
      _
    $region15: #{tpu_custom_call.1} parent=1 // pred_check_branch
      %38 = sbr.rel (0) target = $region17
    $region16: #{tpu_custom_call.1} parent=1 // pred_region
      %s40 = ssub.s32 1536, 1536
      %41 = vsyncadd [#allocation6], %s40
      %s42 = sshll.u32 [#allocation7], 4
      %s43 = int_to_ptr.vmem [resolvable:$true] %s42
      %48 = dma.hbm_to_vmem [thread:$0]  %s3, 1536, %s43, [#allocation6], 128, 128, 8
    $region17: #{tpu_custom_call.1} parent=1 // pred_fallthru
      _
    // Predicated region
    $region18: #{tpu_custom_call.1} parent=1 // pred_check
      _
    $region19: #{tpu_custom_call.1} parent=1 // pred_check_branch
      %50 = sbr.rel (0) target = $region21
    $region20: #{tpu_custom_call.1} parent=1 // pred_region
      _
    $region21: #{tpu_custom_call.1} parent=1 // pred_fallthru
      _
    // Predicated region
    $region22: #{tpu_custom_call.1} parent=1 // pred_check
      _
    $region23: #{tpu_custom_call.1} parent=1 // pred_check_branch
      %52 = sbr.rel (0) target = $region25
    $region24: #{tpu_custom_call.1} parent=1 // pred_region
      %53 = dma.done [#allocation3], 128
    $region25: #{tpu_custom_call.1} parent=1 // pred_fallthru
      _
    // Predicated region
    $region26: #{tpu_custom_call.1} parent=1 // pred_check
      _
    $region27: #{tpu_custom_call.1} parent=1 // pred_check_branch
      %55 = sbr.rel (0) target = $region29
    $region28: #{tpu_custom_call.1} parent=1 // pred_region
      %56 = dma.done [#allocation6], 1536
    $region29: #{tpu_custom_call.1} parent=1 // pred_fallthru
      _
    // Predicated region
    $region30: #{tpu_custom_call.1} parent=1 // pred_check
      _
    $region31: #{tpu_custom_call.1} parent=1 // pred_check_branch
      %58 = sbr.rel (0) target = $region33
    $region32: #{tpu_custom_call.1} parent=1 // pred_region
      %59 = dma.done [#allocation6], 1536
    $region33: #{tpu_custom_call.1} parent=1 // pred_fallthru
      _
    %v60 = vld [vmem:[#allocation2] sm:$0xff]
    %v61 = vld [vmem:[#allocation5] sm:$0xff]
    %v62 = vld [vmem:[#allocation5 + $0x8] sm:$0xff]
    %v63 = vld [vmem:[#allocation5 + $0x10] sm:$0xff]
    %v64 = vld [vmem:[#allocation5 + $0x18] sm:$0xff]
    %v65 = vld [vmem:[#allocation5 + $0x20] sm:$0xff]
    %v66 = vld [vmem:[#allocation5 + $0x28] sm:$0xff]
    %v67 = vld [vmem:[#allocation5 + $0x30] sm:$0xff]
    %v68 = vld [vmem:[#allocation5 + $0x38] sm:$0xff]
    %v69 = vld [vmem:[#allocation5 + $0x40] sm:$0xff]
    %v70 = vld [vmem:[#allocation5 + $0x48] sm:$0xff]
    %v71 = vld [vmem:[#allocation5 + $0x50] sm:$0xff]
    %v72 = vld [vmem:[#allocation5 + $0x58] sm:$0xff]
    %v73 = vld [vmem:[%s2] sm:$0x1]
    %v75 = vlaneseq
    %v76 = vshrl.u32 %v75, 7
    %v77 = vsub.s32 0, %v76
    %v78 = vrot.slane %v73, %v77
    %vm80 = vcmask 785408
    %v82 = vsel %vm80, %v60, 0
    %84 = vmatprep.subr.mxu0 0.0
    %85 = vmatpush1.msra.mxu0 %v61
    %86 = vmatprep.subr.mxu0 0.0
    %87 = vmatpush1.msra.mxu0 %v62
    %88 = vmatprep.subr.mxu0 0.0
    %89 = vmatpush1.msra.mxu0 %v63
    %90 = vmatprep.subr.mxu0 0.0
    %91 = vmatpush1.msra.mxu0 %v64
    %92 = vmatprep.subr.mxu0 0.0
    %93 = vmatpush1.msra.mxu0 %v65
    %94 = vmatprep.subr.mxu0 0.0
    %95 = vmatpush1.msra.mxu0 %v66
    %96 = vmatprep.subr.mxu0 0.0
    %97 = vmatpush1.msra.mxu0 %v67
    %98 = vmatprep.subr.mxu0 0.0
    %99 = vmatpush1.msra.mxu0 %v68
    %100 = vmatprep.subr.mxu0 0.0
    %101 = vmatpush1.msra.mxu0 %v69
    %102 = vmatprep.subr.mxu0 0.0
    %103 = vmatpush1.msra.mxu0 %v70
    %104 = vmatprep.subr.mxu0 0.0
    %105 = vmatpush1.msra.mxu0 %v71
    %106 = vmatprep.subr.mxu0 0.0
    %107 = vmatpush1.msra.mxu0 %v72
    %108 = vmatprep.subr.mxu0 0.0
    %109 = vmatpush1.msra.mxu0 0.0
    %110 = vmatprep.subr.mxu0 0.0
    %111 = vmatpush1.msra.mxu0 0.0
    %112 = vmatprep.subr.mxu0 0.0
    %113 = vmatpush1.msra.mxu0 0.0
    %114 = vmatprep.subr.mxu0 0.0
    %115 = vmatpush1.msra.mxu0 0.0
    %116 = vmatprep.subr.mxu0 0.0
    %117 = vmatpush1.msra.mxu0 0.0
    %118 = vmatprep.subr.mxu0 0.0
    %119 = vmatpush1.msra.mxu0 0.0
    %120 = vmatprep.subr.mxu0 0.0
    %121 = vmatpush1.msra.mxu0 0.0
    %122 = vmatprep.subr.mxu0 0.0
    %123 = vmatpush1.msra.mxu0 0.0
    %124 = vmatprep.subr.mxu0 0.0
    %125 = vmatpush1.msra.mxu0 0.0
    %126 = vmatprep.subr.mxu0 0.0
    %127 = vmatpush1.msra.mxu0 0.0
    %128 = vmatprep.subr.mxu0 0.0
    %129 = vmatpush1.msra.mxu0 0.0
    %130 = vmatprep.subr.mxu0 0.0
    %131 = vmatpush1.msra.mxu0 0.0
    %132 = vmatprep.subr.mxu0 0.0
    %133 = vmatpush1.msra.mxu0 0.0
    %134 = vmatprep.subr.mxu0 0.0
    %135 = vmatpush1.msra.mxu0 0.0
    %136 = vmatprep.subr.mxu0 0.0
    %137 = vmatpush1.msra.mxu0 0.0
    %138 = vmatprep.subr.mxu0 0.0
    %139 = vmatpush1.msra.mxu0 0.0
    %140 = vmatprep.subr.mxu0 0.0
    %141 = vmatpush1.msra.mxu0 0.0
    %142 = vmatprep.subr.mxu0 0.0
    %143 = vmatpush1.msra.mxu0 0.0
    %144 = vmatprep.subr.mxu0 0.0
    %145 = vmatpush1.msra.mxu0 0.0
    %146 = vmatprep.subr.mxu0 0.0
    %147 = vmatpush1.msra.mxu0 0.0
    %148 = vmatprep.mubr.f32.mxu0 0.0
    %149 = vmatmul.mubr.f32.gmra.mrb[0].mxu0 %v82
    %v150 = vpop.f32.mrb[0].mxu0
    %v151 = vadd.f32 %v78, %v150
    %v152 = vpop.f32.mrb[0].mxu0
    %153 = vdwg.mxu0
    %v154 = vtanh.pop %v151
    %v155 = vld [vmem:[#allocation7] sm:$0xff]
    %v156 = vld [vmem:[#allocation7 + $0x8] sm:$0xff]
    %v157 = vld [vmem:[#allocation7 + $0x10] sm:$0xff]
    %v158 = vld [vmem:[#allocation7 + $0x18] sm:$0xff]
    %v159 = vld [vmem:[#allocation7 + $0x20] sm:$0xff]
    %v160 = vld [vmem:[#allocation7 + $0x28] sm:$0xff]
    %v161 = vld [vmem:[#allocation7 + $0x30] sm:$0xff]
    %v162 = vld [vmem:[#allocation7 + $0x38] sm:$0xff]
    %v163 = vld [vmem:[#allocation7 + $0x40] sm:$0xff]
    %v164 = vld [vmem:[#allocation7 + $0x48] sm:$0xff]
    %v165 = vld [vmem:[#allocation7 + $0x50] sm:$0xff]
    %v166 = vld [vmem:[#allocation7 + $0x58] sm:$0xff]
    %v167 = vld [vmem:[%s4] sm:$0x1]
    %v169 = vlaneseq
    %v170 = vshrl.u32 %v169, 7
    %v171 = vsub.s32 0, %v170
    %v172 = vrot.slane %v167, %v171
    %v175 = vsel %vm80, %v154, 0
    %177 = vmatprep.subr.mxu0 0.0
    %178 = vmatpush1.msra.mxu0 %v155
    %179 = vmatprep.subr.mxu0 0.0
    %180 = vmatpush1.msra.mxu0 %v156
    %181 = vmatprep.subr.mxu0 0.0
    %182 = vmatpush1.msra.mxu0 %v157
    %183 = vmatprep.subr.mxu0 0.0
    %184 = vmatpush1.msra.mxu0 %v158
    %185 = vmatprep.subr.mxu0 0.0
    %186 = vmatpush1.msra.mxu0 %v159
    %187 = vmatprep.subr.mxu0 0.0
    %188 = vmatpush1.msra.mxu0 %v160
    %189 = vmatprep.subr.mxu0 0.0
    %190 = vmatpush1.msra.mxu0 %v161
    %191 = vmatprep.subr.mxu0 0.0
    %192 = vmatpush1.msra.mxu0 %v162
    %193 = vmatprep.subr.mxu0 0.0
    %194 = vmatpush1.msra.mxu0 %v163
    %195 = vmatprep.subr.mxu0 0.0
    %196 = vmatpush1.msra.mxu0 %v164
    %197 = vmatprep.subr.mxu0 0.0
    %198 = vmatpush1.msra.mxu0 %v165
    %199 = vmatprep.subr.mxu0 0.0
    %200 = vmatpush1.msra.mxu0 %v166
    %201 = vmatprep.subr.mxu0 0.0
    %202 = vmatpush1.msra.mxu0 0.0
    %203 = vmatprep.subr.mxu0 0.0
    %204 = vmatpush1.msra.mxu0 0.0
    %205 = vmatprep.subr.mxu0 0.0
    %206 = vmatpush1.msra.mxu0 0.0
    %207 = vmatprep.subr.mxu0 0.0
    %208 = vmatpush1.msra.mxu0 0.0
    %209 = vmatprep.subr.mxu0 0.0
    %210 = vmatpush1.msra.mxu0 0.0
    %211 = vmatprep.subr.mxu0 0.0
    %212 = vmatpush1.msra.mxu0 0.0
    %213 = vmatprep.subr.mxu0 0.0
    %214 = vmatpush1.msra.mxu0 0.0
    %215 = vmatprep.subr.mxu0 0.0
    %216 = vmatpush1.msra.mxu0 0.0
    %217 = vmatprep.subr.mxu0 0.0
    %218 = vmatpush1.msra.mxu0 0.0
    %219 = vmatprep.subr.mxu0 0.0
    %220 = vmatpush1.msra.mxu0 0.0
    %221 = vmatprep.subr.mxu0 0.0
    %222 = vmatpush1.msra.mxu0 0.0
    %223 = vmatprep.subr.mxu0 0.0
    %224 = vmatpush1.msra.mxu0 0.0
    %225 = vmatprep.subr.mxu0 0.0
    %226 = vmatpush1.msra.mxu0 0.0
    %227 = vmatprep.subr.mxu0 0.0
    %228 = vmatpush1.msra.mxu0 0.0
    %229 = vmatprep.subr.mxu0 0.0
    %230 = vmatpush1.msra.mxu0 0.0
    %231 = vmatprep.subr.mxu0 0.0
    %232 = vmatpush1.msra.mxu0 0.0
    %233 = vmatprep.subr.mxu0 0.0
    %234 = vmatpush1.msra.mxu0 0.0
    %235 = vmatprep.subr.mxu0 0.0
    %236 = vmatpush1.msra.mxu0 0.0
    %237 = vmatprep.subr.mxu0 0.0
    %238 = vmatpush1.msra.mxu0 0.0
    %239 = vmatprep.subr.mxu0 0.0
    %240 = vmatpush1.msra.mxu0 0.0
    %241 = vmatprep.mubr.f32.mxu0 0.0
    %242 = vmatmul.mubr.f32.gmra.mrb[0].mxu0 %v175
    %v243 = vpop.f32.mrb[0].mxu0
    %v244 = vadd.f32 %v172, %v243
    %v245 = vpop.f32.mrb[0].mxu0
    %246 = vdwg.mxu0
    %247 = vst.msk [vmem:[#allocation8] sm:$0xff] %vm80, %v244
    // Predicated region
    $region34: #{tpu_custom_call.1} parent=1 // pred_check
      _
    $region35: #{tpu_custom_call.1} parent=1 // pred_check_branch
      %249 = sbr.rel (0) target = $region37
    $region36: #{tpu_custom_call.1} parent=1 // pred_region
      %s251 = ssub.s32 128, 128
      %252 = vsyncadd [#allocation4], %s251
      %s254 = sshll.u32 [#allocation8], 4
      %s255 = int_to_ptr.vmem [resolvable:$true] %s254
      %257 = dma.vmem_to_hbm [thread:$0]  %s255, 128, %s5, [#allocation4]
    $region37: #{tpu_custom_call.1} parent=1 // pred_fallthru
      _
    // Predicated region
    $region38: #{tpu_custom_call.1} parent=1 // pred_check
      _
    $region39: #{tpu_custom_call.1} parent=1 // pred_check_branch
      %259 = sbr.rel (0) target = $region41
    $region40: #{tpu_custom_call.1} parent=1 // pred_region
      %260 = dma.done [#allocation4], 128
    $region41: #{tpu_custom_call.1} parent=1 // pred_fallthru
      _
    %261 = vsyncpa [#allocation3], 1
    %262 = vsyncpa [#allocation6], 1
    %263 = vsyncpa [#allocation4], 1

</llo_original>
